<compile_context>
chip_gen: v6e
topology: v6e:2x2x1
jax: 0.10.0
libtpu: 0.0.40
codegen_flags: <defaults>
</compile_context>

<pallas_src>
import functools

import jax
import jax.numpy as jnp
from jax import lax
from jax.experimental import pallas as pl
from jax.experimental.pallas import tpu as pltpu


def _round_up(x, m):
    return (x + m - 1) // m * m


def _focal_loss_kernel(logits_ref, tgt_ref, out_ref, *,
                       alpha, gamma, sim_w, n_valid, lane_tile, n_half,
                       needs_mask):
    j = pl.program_id(2)

    # (Re-)initialize this (split, batch) accumulator on its first spatial tile.
    @pl.when(j == 0)
    def _():
        out_ref[...] = jnp.zeros_like(out_ref)

    x = logits_ref[...].astype(jnp.float32)        # (C, tn)  classes on sublanes
    t = tgt_ref[...]                               # (1, tn)  int32 class ids
    C, tn = x.shape

    # Numerically stable softmax pieces, reduced over the small class axis.
    m = jnp.max(x, axis=0, keepdims=True)          # (1, tn)
    xm = x - m
    sumexp = jnp.sum(jnp.exp(xm), axis=0, keepdims=True)   # (1, tn)

    # TODO(synk): out-of-range / ignore_index targets (e.g. -100, 255) are not
    # handled; targets must lie in [0, C) as in the reference usage.
    onehot = lax.broadcasted_iota(jnp.int32, (C, tn), 0) == t
    xm_t = jnp.sum(jnp.where(onehot, xm, 0.0), axis=0, keepdims=True)

    ce = jnp.log(sumexp) - xm_t                    # = logsumexp(x) - x_target
    pt = jnp.exp(-ce)                              # tiny (1, tn) EUP exp

    one_minus_pt = 1.0 - pt
    if float(gamma) == int(gamma):                 # integer gamma: VPU multiplies
        w = lax.integer_pow(one_minus_pt, int(gamma))
    else:                                          # float gamma: guard pow(<=0)
        omp = jnp.maximum(one_minus_pt, 0.0)
        w = jnp.where(omp > 0.0, omp ** gamma, 0.0)

    focal = (alpha * sim_w) * w * ce               # (1, tn)

    if needs_mask:
        p = pl.program_id(0)
        j_global = p * n_half + j
        first_ragged = n_valid // lane_tile        # first tile containing padding

        @pl.when(j_global < first_ragged)          # interior tiles: single vadd
        def _():
            out_ref[...] = out_ref[...] + focal

        @pl.when(j_global >= first_ragged)         # ragged / phantom tiles: mask
        def _():
            col = (lax.broadcasted_iota(jnp.int32, focal.shape, 1)
                   + j_global * lane_tile)
            out_ref[...] = out_ref[...] + jnp.where(col < n_valid, focal, 0.0)
    else:
        out_ref[...] = out_ref[...] + focal


def similarity_weighted_focal_loss(inputs, targets, similarity_weight=1.0,
                                   alpha=1.0, gamma=2.0, size_average=True,
                                   max_lane_tile=8192):
    """inputs: [B, C, H, W] float logits (f32 or bf16); targets: [B, H, W] ints."""
    # TODO(synk): per-class `weight` (module __init__ default None) not implemented.
    B, C, H, W = inputs.shape
    S = H * W

    # NCHW already has spatial trailing -> [B, C, S] is a free reshape; logits
    # keep their input dtype (bf16 halves HBM traffic) until the in-kernel cast.
    x = inputs.reshape(B, C, S)
    t = targets.reshape(B, 1, S).astype(jnp.int32)

    # Generation-aware VMEM budget: counts double-buffered I/O blocks plus the
    # live f32 intermediates the kernel materializes (xm, exp, onehot/selects).
    try:
        info = pltpu.get_tpu_info()
        vmem_phys = int(getattr(info, "vmem_capacity_bytes", 64 << 20))
    except Exception:
        vmem_phys = 64 << 20                       # conservative (v7x-safe) default
    vmem_limit = int(min(vmem_phys // 2, 64 << 20))   # 64 MiB on v5e/v6e, 32 MiB on v7x
    budget = (vmem_limit * 3) // 4

    in_bytes = jnp.dtype(x.dtype).itemsize

    def _tile_bytes(tn_):
        io = 2 * (C * tn_ * in_bytes + tn_ * 4) + 2 * tn_ * 4   # double-buffered blocks
        temps = 6 * C * tn_ * 4 + 8 * tn_ * 4                    # live f32 temporaries
        return io + temps

    tn = min(_round_up(S, 128), _round_up(max_lane_tile, 128))
    tn = max(tn, 128)
    while tn > 128 and _tile_bytes(tn) > budget:
        tn -= 128

    n_tiles = (S + tn - 1) // tn
    # Leading 2-way spatial split so both v7x TensorCores get work even for B=1.
    P = 2 if n_tiles >= 2 else 1
    n_half = (n_tiles + P - 1) // P
    phantom = (P * n_half != n_tiles)              # odd tile count -> one empty tile
    needs_mask = (S % tn != 0) or phantom
    last_block = n_tiles - 1

    def _spatial_block(p, j):
        blk = p * n_half + j
        if phantom:
            blk = jnp.minimum(blk, last_block)     # clamp phantom tile (masked anyway)
        return blk

    kernel = functools.partial(
        _focal_loss_kernel,
        alpha=float(alpha), gamma=float(gamma), sim_w=float(similarity_weight),
        n_valid=S, lane_tile=tn, n_half=n_half, needs_mask=needs_mask)

    partials = pl.pallas_call(
        kernel,
        out_shape=jax.ShapeDtypeStruct((P, B, 1, tn), jnp.float32),
        grid_spec=pltpu.PrefetchScalarGridSpec(
            num_scalar_prefetch=0,
            grid=(P, B, n_half),
            in_specs=[
                pl.BlockSpec((None, C, tn), lambda p, b, j: (b, 0, _spatial_block(p, j))),
                pl.BlockSpec((None, 1, tn), lambda p, b, j: (b, 0, _spatial_block(p, j))),
            ],
            out_specs=pl.BlockSpec((None, None, 1, tn), lambda p, b, j: (p, b, 0, 0)),
        ),
        compiler_params=pltpu.CompilerParams(
            dimension_semantics=("parallel", "parallel", "arbitrary"),
            vmem_limit_bytes=vmem_limit),
    )(x, t)

    total = jnp.sum(partials)                      # tiny (P, B, 1, tn) reduce in XLA
    denom = float(B * S) if size_average else 1.0
    return total / denom


def _reference(inputs, targets, similarity_weight=1.0, alpha=1.0, gamma=2.0,
               size_average=True):
    """Pure-JAX reference mirroring torch.nn.functional.cross_entropy + focal."""
    B, C, H, W = inputs.shape
    x = jnp.transpose(inputs, (0, 2, 3, 1)).reshape(-1, C).astype(jnp.float32)
    t = targets.reshape(-1).astype(jnp.int32)
    lse = jax.scipy.special.logsumexp(x, axis=-1)
    x_t = jnp.take_along_axis(x, t[:, None], axis=-1)[:, 0]
    ce = lse - x_t
    pt = jnp.exp(-ce)
    focal = alpha * (1.0 - pt) ** gamma * ce * similarity_weight
    return jnp.mean(focal) if size_average else jnp.sum(focal)


if __name__ == "__main__":
    key = jax.random.PRNGKey(0)

    # Case 1: divisible spatial extent, size_average=True (single tile).
    k1, k2, key = jax.random.split(key, 3)
    B, C, H, W = 2, 4, 16, 16
    inputs = jax.random.normal(k1, (B, C, H, W), dtype=jnp.float32)
    targets = jax.random.randint(k2, (B, H, W), 0, C, dtype=jnp.int32)
    loss = jax.block_until_ready(
        similarity_weighted_focal_loss(inputs, targets, similarity_weight=0.75))
    ref = _reference(inputs, targets, similarity_weight=0.75)
    assert jnp.allclose(loss, ref, rtol=1e-5, atol=1e-6), (loss, ref)

    # Case 2: ragged spatial extent (S % 128 != 0), sum reduction.
    k1, k2, key = jax.random.split(key, 3)
    B, C, H, W = 2, 4, 16, 10
    inputs = jax.random.normal(k1, (B, C, H, W), dtype=jnp.float32)
    targets = jax.random.randint(k2, (B, H, W), 0, C, dtype=jnp.int32)
    loss = jax.block_until_ready(
        similarity_weighted_focal_loss(inputs, targets, similarity_weight=0.5,
                                       size_average=False))
    ref = _reference(inputs, targets, similarity_weight=0.5, size_average=False)
    assert jnp.allclose(loss, ref, rtol=1e-5, atol=1e-5), (loss, ref)

    # Case 3: B=1, multi-tile with odd tile count -> exercises the 2-way
    # TensorCore split, the clamped phantom tile, and float gamma.
    k1, k2, key = jax.random.split(key, 3)
    B, C, H, W = 1, 4, 24, 16
    inputs = jax.random.normal(k1, (B, C, H, W), dtype=jnp.float32)
    targets = jax.random.randint(k2, (B, H, W), 0, C, dtype=jnp.int32)
    loss = jax.block_until_ready(
        similarity_weighted_focal_loss(inputs, targets, similarity_weight=1.25,
                                       gamma=2.5, max_lane_tile=128))
    ref = _reference(inputs, targets, similarity_weight=1.25, gamma=2.5)
    assert jnp.allclose(loss, ref, rtol=1e-5, atol=1e-6), (loss, ref)

    print("KERNEL_OK")
</pallas_src>

<mosaic_0001>
module attributes {stable_mosaic.version = 11 : i64} {
  func.func @_focal_loss_kernel(%arg0: i32, %arg1: i32, %arg2: i32, %arg3: memref<1x4x256xf32, #tpu.memory_space<vmem>>, %arg4: memref<1x1x256xi32, #tpu.memory_space<vmem>>, %arg5: memref<1x1x1x256xf32, #tpu.memory_space<vmem>>) attributes {dimension_semantics = [#tpu.dimension_semantics<parallel>, #tpu.dimension_semantics<parallel>, #tpu.dimension_semantics<arbitrary>], iteration_bounds = array<i64: 1, 2, 1>, scalar_prefetch = 0 : i64, scratch_operands = 0 : i64, tpu.core_type = #tpu.core_type<tc>, window_params = [{transform_indices = @transform_0, window_bounds = array<i64: 1, 4, 256>}, {transform_indices = @transform_1, window_bounds = array<i64: 1, 1, 256>}, {transform_indices = @transform_2, window_bounds = array<i64: 1, 1, 1, 256>}]} {
    %c0_i32 = arith.constant 0 : i32
    %0 = arith.cmpi eq, %arg2, %c0_i32 : i32
    %1 = arith.extui %0 : i1 to i32
    %c0_i32_0 = arith.constant 0 : i32
    %2 = arith.cmpi ne, %1, %c0_i32_0 : i32
    scf.if %2 {
      %cst_20 = arith.constant 0.000000e+00 : f32
      %38 = vector.broadcast %cst_20 : f32 to vector<1x256xf32>
      %c0_21 = arith.constant 0 : index
      %c0_22 = arith.constant 0 : index
      %c0_23 = arith.constant 0 : index
      %c0_24 = arith.constant 0 : index
      %39 = vector.load %arg5[%c0_21, %c0_22, %c0_23, %c0_24] : memref<1x1x1x256xf32, #tpu.memory_space<vmem>>, vector<1x1x1x256xf32>
      %40 = vector.shape_cast %39 : vector<1x1x1x256xf32> to vector<1x256xf32>
      %41 = vector.shape_cast %38 : vector<1x256xf32> to vector<1x1x1x256xf32>
      tpu.vector_store %arg5[%c0_21, %c0_22, %c0_23, %c0_24], %41 {strides = array<i32>} : memref<1x1x1x256xf32, #tpu.memory_space<vmem>>, vector<1x1x1x256xf32>,
    } else {
    }
    %c0 = arith.constant 0 : index
    %c0_1 = arith.constant 0 : index
    %c0_2 = arith.constant 0 : index
    %3 = vector.load %arg3[%c0, %c0_1, %c0_2] : memref<1x4x256xf32, #tpu.memory_space<vmem>>, vector<1x4x256xf32>
    %4 = vector.shape_cast %3 : vector<1x4x256xf32> to vector<4x256xf32>
    %c0_3 = arith.constant 0 : index
    %c0_4 = arith.constant 0 : index
    %c0_5 = arith.constant 0 : index
    %5 = vector.load %arg4[%c0_3, %c0_4, %c0_5] : memref<1x1x256xi32, #tpu.memory_space<vmem>>, vector<1x1x256xi32>
    %6 = vector.shape_cast %5 : vector<1x1x256xi32> to vector<1x256xi32>
    %cst = arith.constant dense<0xFF800000> : vector<256xf32>
    %7 = vector.multi_reduction <maximumf>, %4, %cst [0] : vector<4x256xf32> to vector<256xf32>
    %8 = vector.shape_cast %7 : vector<256xf32> to vector<1x256xf32>
    %9 = vector.broadcast %8 : vector<1x256xf32> to vector<4x256xf32>
    %10 = arith.subf %4, %9 : vector<4x256xf32>
    %11 = math.exp %10 : vector<4x256xf32>
    %cst_6 = arith.constant dense<0.000000e+00> : vector<256xf32>
    %12 = vector.multi_reduction <add>, %11, %cst_6 [0] : vector<4x256xf32> to vector<256xf32>
    %13 = vector.shape_cast %12 : vector<256xf32> to vector<1x256xf32>
    %14 = tpu.iota {dimensions = array<i32: 0>} : vector<4x256xi32>
    %15 = vector.broadcast %6 : vector<1x256xi32> to vector<4x256xi32>
    %16 = arith.cmpi eq, %14, %15 : vector<4x256xi32>
    %cst_7 = arith.constant 0.000000e+00 : f32
    %17 = vector.broadcast %cst_7 : f32 to vector<4x256xf32>
    %18 = arith.select %16, %10, %17 : vector<4x256xi1>, vector<4x256xf32>
    %cst_8 = arith.constant dense<0.000000e+00> : vector<256xf32>
    %19 = vector.multi_reduction <add>, %18, %cst_8 [0] : vector<4x256xf32> to vector<256xf32>
    %20 = vector.shape_cast %19 : vector<256xf32> to vector<1x256xf32>
    %21 = math.log %13 : vector<1x256xf32>
    %22 = arith.subf %21, %20 : vector<1x256xf32>
    %cst_9 = arith.constant 0.000000e+00 : f32
    %23 = vector.broadcast %cst_9 : f32 to vector<1x256xf32>
    %24 = arith.subf %23, %22 : vector<1x256xf32>
    %25 = math.exp %24 : vector<1x256xf32>
    %cst_10 = arith.constant 1.000000e+00 : f32
    %26 = vector.broadcast %cst_10 : f32 to vector<1x256xf32>
    %27 = arith.subf %26, %25 : vector<1x256xf32>
    %28 = arith.mulf %27, %27 : vector<1x256xf32>
    %cst_11 = arith.constant 7.500000e-01 : f32
    %29 = vector.broadcast %cst_11 : f32 to vector<1x256xf32>
    %30 = arith.mulf %29, %28 : vector<1x256xf32>
    %31 = arith.mulf %30, %22 : vector<1x256xf32>
    %c0_12 = arith.constant 0 : index
    %c0_13 = arith.constant 0 : index
    %c0_14 = arith.constant 0 : index
    %c0_15 = arith.constant 0 : index
    %32 = vector.load %arg5[%c0_12, %c0_13, %c0_14, %c0_15] : memref<1x1x1x256xf32, #tpu.memory_space<vmem>>, vector<1x1x1x256xf32>
    %33 = vector.shape_cast %32 : vector<1x1x1x256xf32> to vector<1x256xf32>
    %34 = arith.addf %33, %31 : vector<1x256xf32>
    %c0_16 = arith.constant 0 : index
    %c0_17 = arith.constant 0 : index
    %c0_18 = arith.constant 0 : index
    %c0_19 = arith.constant 0 : index
    %35 = vector.load %arg5[%c0_16, %c0_17, %c0_18, %c0_19] : memref<1x1x1x256xf32, #tpu.memory_space<vmem>>, vector<1x1x1x256xf32>
    %36 = vector.shape_cast %35 : vector<1x1x1x256xf32> to vector<1x256xf32>
    %37 = vector.shape_cast %34 : vector<1x256xf32> to vector<1x1x1x256xf32>
    tpu.vector_store %arg5[%c0_16, %c0_17, %c0_18, %c0_19], %37 {strides = array<i32>} : memref<1x1x1x256xf32, #tpu.memory_space<vmem>>, vector<1x1x1x256xf32>,
    return
  }
  func.func @transform_0(%arg0: i32, %arg1: i32, %arg2: i32) -> (i32, i32, i32) {
    %c1_i32 = arith.constant 1 : i32
    %0 = arith.muli %arg0, %c1_i32 : i32
    %1 = arith.addi %0, %arg2 : i32
    %c0_i32 = arith.constant 0 : i32
    %c0_i32_0 = arith.constant 0 : i32
    return %arg1, %c0_i32, %1 : i32, i32, i32
  }
  func.func @transform_1(%arg0: i32, %arg1: i32, %arg2: i32) -> (i32, i32, i32) {
    %c1_i32 = arith.constant 1 : i32
    %0 = arith.muli %arg0, %c1_i32 : i32
    %1 = arith.addi %0, %arg2 : i32
    %c0_i32 = arith.constant 0 : i32
    %c0_i32_0 = arith.constant 0 : i32
    return %arg1, %c0_i32, %1 : i32, i32, i32
  }
  func.func @transform_2(%arg0: i32, %arg1: i32, %arg2: i32) -> (i32, i32, i32, i32) {
    %c0_i32 = arith.constant 0 : i32
    %c0_i32_0 = arith.constant 0 : i32
    %c0_i32_1 = arith.constant 0 : i32
    return %arg0, %arg1, %c0_i32, %c0_i32_0 : i32, i32, i32, i32
  }
}

</mosaic_0001>

<llo_original>
// kernel: tpu_custom_call.1
$region0: #{tpu_custom_call.1}
  #allocation0 [shape = 'u32[]', space=smem, size = 0x4, offset = 0x4, fixed_abs, tag = 'smem constant byte address 0x4 - core index']
  #allocation1 [shape = 'u32[144,128]{1,0:T(1,128)}', space=vmem, size = 0x12000, scoped, tag = 'internal scratch']
  %s0 = inlined_call_operand.hbm [shape: f32[2,4,256], index: 0, kind: input, shape index: {}]
  %s1 = inlined_call_operand.hbm [shape: s32[2,1,256], index: 1, kind: input, shape index: {}]
  %s2 = inlined_call_operand.hbm [shape: f32[1,2,1,256], index: 2, kind: output, shape index: {}]
  %s3 = sld [smem:[#allocation0]]
  $region53: #{tpu_custom_call.1} parent=0
    _
  %s5 = ssub.s32 1, %s3
  %s6 = scalar_select 0, %s5, %s3
  $region1: #{tpu_custom_call.1} parent=0
    #allocation2 [shape = 'u8[8192]{0}', space=vmem, size = 0x2000, scoped, tag = 'input window, operand 0']
    #allocation3 [shape = 's32[2]{0}', space=sflag, size = 0x8, scoped, tag = 'scoped memory for tpu_custom_call.1']
    #allocation4 [shape = 's32[2]{0}', space=sflag, size = 0x8, scoped, tag = 'scoped memory for tpu_custom_call.1']
    #allocation5 [shape = 'u8[2048]{0}', space=vmem, size = 0x800, scoped, tag = 'input window, operand 1']
    #allocation6 [shape = 's32[2]{0}', space=sflag, size = 0x8, scoped, tag = 'scoped memory for tpu_custom_call.1']
    #allocation7 [shape = 'u8[2048]{0}', space=vmem, size = 0x800, scoped, tag = 'output window, operand 0']
    %7 = vsyncpa [#allocation3], 0
    %s8 = scalar_lea.sflag [#allocation3], 1
    %9 = vsyncpa %s8, 0
    %10 = vsyncpa [#allocation6], 0
    %s11 = scalar_lea.sflag [#allocation6], 1
    %12 = vsyncpa %s11, 0
    %13 = vsyncpa [#allocation4], 0
    %s14 = scalar_lea.sflag [#allocation4], 1
    %15 = vsyncpa %s14, 0
    loop: start=0, step=1, limit=4
    $region2: #{tpu_custom_call.1} parent=1 // loop_pre_header
      _
    $region3: #{tpu_custom_call.1} parent=1 // loop_header
      %s17 = sphi 0, %s21
      %p18 = scmp.ge.s32.totalorder %s17, 4
      %s24 = sphi 0, %s43
      %s25 = sphi 0, %s39
      %s26 = sphi 0, %s35
      %s27 = sphi 0, %s24
      %s28 = sphi 0, %s25
      %s29 = sphi 0, %s26
      %s30 = sphi 0, %s27
      %s31 = sphi 0, %s28
      %s32 = sphi 0, %s29
      %s50 = sphi 0, %s52
      %s53 = sphi 0, %s50
      %s54 = sphi 0, %s53
      %s70 = sphi 0, %s54
      %s80 = sphi 0, %s82
      %s83 = sphi 0, %s80
      %s84 = sphi 0, %s83
      %s100 = sphi 0, %s84
      %s108 = sphi 0, %s110
      %s111 = sphi 0, %s108
      %s112 = sphi 0, %s111
      %s128 = sphi 0, %s112
    $region4: #{tpu_custom_call.1} parent=1 // loop_header_branch
      %20 = sbr.rel (%p18) target = $region8
    $region5: #{tpu_custom_call.1} parent=1 // loop_body
      %s22 = ssub.s32 %s17, 1
      %s23 = ssub.s32 %s17, 2
      %s33 = sadd.s32 1, %s26
      %p34 = scmp.ge.s32.totalorder %s33, 1
      %s35 = scalar_select %p34, 0, %s33
      %s36 = sadd.s32 1, %s25
      %s37 = scalar_select %p34, %s36, %s25
      %p38 = scmp.ge.s32.totalorder %s37, 2
      %s39 = scalar_select %p38, 0, %s37
      %s40 = sadd.s32 1, %s24
      %s41 = scalar_select %p38, %s40, %s24
      %p42 = scmp.ge.s32.totalorder %s41, 1
      %s43 = scalar_select %p42, 0, %s41
      %s44 = sadd.s32 %s24, %s26
      %s45 = sadd.s32 %s43, %s35
      %s46 = ssub.s32 %s25, %s39
      %s47 = ssub.s32 %s44, %s45
      %s48 = sor.u32 %s46, %s47
      %p49 = scmp.eq.s32.totalorder %s48, 0
      %s51 = sadd.s32 %s50, 1
      %s52 = scalar_select %p49, %s50, %s51
      %p55 = pneg %p49
      %p56 = scmp.eq.s32.totalorder %s17, 1
      %p57 = por %p55, %p56
      %p58 = scmp.ne.s32.totalorder %s50, %s53
      %p59 = scmp.eq.s32.totalorder %s17, 0
      %p60 = por %p58, %p59
      %p61 = scmp.ne.s32.totalorder %s50, %s53
      %p62 = scmp.eq.s32.totalorder %s22, 1
      %p63 = por %p61, %p62
      %p64 = scmp.ne.s32.totalorder %s53, %s54
      %p65 = scmp.eq.s32.totalorder %s22, 0
      %p66 = por %p64, %p65
      %p67 = scmp.ne.s32.totalorder %s53, %s54
      %p68 = scmp.eq.s32.totalorder %s23, 1
      %p69 = por %p67, %p68
      %p71 = scmp.ne.s32.totalorder %s54, %s70
      %p72 = scmp.eq.s32.totalorder %s23, 0
      %p73 = por %p71, %p72
      %s74 = sadd.s32 %s24, %s26
      %s75 = sadd.s32 %s43, %s35
      %s76 = ssub.s32 %s25, %s39
      %s77 = ssub.s32 %s74, %s75
      %s78 = sor.u32 %s76, %s77
      %p79 = scmp.eq.s32.totalorder %s78, 0
      %s81 = sadd.s32 %s80, 1
      %s82 = scalar_select %p79, %s80, %s81
      %p85 = pneg %p79
      %p86 = scmp.eq.s32.totalorder %s17, 1
      %p87 = por %p85, %p86
      %p88 = scmp.ne.s32.totalorder %s80, %s83
      %p89 = scmp.eq.s32.totalorder %s17, 0
      %p90 = por %p88, %p89
      %p91 = scmp.ne.s32.totalorder %s80, %s83
      %p92 = scmp.eq.s32.totalorder %s22, 1
      %p93 = por %p91, %p92
      %p94 = scmp.ne.s32.totalorder %s83, %s84
      %p95 = scmp.eq.s32.totalorder %s22, 0
      %p96 = por %p94, %p95
      %p97 = scmp.ne.s32.totalorder %s83, %s84
      %p98 = scmp.eq.s32.totalorder %s23, 1
      %p99 = por %p97, %p98
      %p101 = scmp.ne.s32.totalorder %s84, %s100
      %p102 = scmp.eq.s32.totalorder %s23, 0
      %p103 = por %p101, %p102
      %s104 = ssub.s32 %s24, %s43
      %s105 = ssub.s32 %s25, %s39
      %s106 = sor.u32 %s104, %s105
      %p107 = scmp.eq.s32.totalorder %s106, 0
      %s109 = sadd.s32 %s108, 1
      %s110 = scalar_select %p107, %s108, %s109
      %p113 = pneg %p107
      %p114 = scmp.eq.s32.totalorder %s17, 1
      %p115 = por %p113, %p114
      %p116 = scmp.ne.s32.totalorder %s108, %s111
      %p117 = scmp.eq.s32.totalorder %s17, 0
      %p118 = por %p116, %p117
      %p119 = scmp.ne.s32.totalorder %s108, %s111
      %p120 = scmp.eq.s32.totalorder %s22, 1
      %p121 = por %p119, %p120
      %p122 = scmp.ne.s32.totalorder %s111, %s112
      %p123 = scmp.eq.s32.totalorder %s22, 0
      %p124 = por %p122, %p123
      %p125 = scmp.ne.s32.totalorder %s111, %s112
      %p126 = scmp.eq.s32.totalorder %s23, 1
      %p127 = por %p125, %p126
      %p129 = scmp.ne.s32.totalorder %s112, %s128
      %p130 = scmp.eq.s32.totalorder %s23, 0
      %p131 = por %p129, %p130
      %p132 = scmp.le.s32.totalorder 1, %s17
      %p133 = scmp.lt.s32.totalorder %s17, 3
      %p134 = pnand %p132, %p133
      %p135 = pneg %p134
      // Predicated region
      $region9: #{tpu_custom_call.1} parent=5 // pred_check
        _
      $region10: #{tpu_custom_call.1} parent=5 // pred_check_branch
        %137 = sbr.rel (%p134) target = $region12
      $region11: #{tpu_custom_call.1} parent=5 // pred_region
        %s138 = ssub.s32 %s17, 1
      $region12: #{tpu_custom_call.1} parent=5 // pred_fallthru
        _
      %p139 = scmp.lt.s32.totalorder %s17, 2
      // Predicated region
      $region13: #{tpu_custom_call.1} parent=5 // pred_check
        %p140 = pneg %p139
      $region14: #{tpu_custom_call.1} parent=5 // pred_check_branch
        %142 = sbr.rel (%p140) target = $region16
      $region15: #{tpu_custom_call.1} parent=5 // pred_region
        // Predicated region
        $region17: #{tpu_custom_call.1} parent=15 // pred_check
          %p143 = pneg %p60
        $region18: #{tpu_custom_call.1} parent=15 // pred_check_branch
          %145 = sbr.rel (%p143) target = $region20
        $region19: #{tpu_custom_call.1} parent=15 // pred_region
          %s146 = sand.u32 %s50, 1
          %s147 = scalar_lea.sflag [#allocation3], %s146
          %s148 = sand.u32 %s50, 1
          %s149 = smul.addr %s148, 8
          %s150 = scalar_lea.vmem [#allocation2], %s149
          %s151 = sadd.s32 %s24, %s26
          %s152 = smul.u32 2, %s151
          %s154 = ssub.s32 128, 128
          %155 = vsyncadd %s147, %s154
          %s156 = smul.addr %s25, 2
          %s157 = sadd.s32 %s152, %s156
          %s158 = smul.addr %s157, 64
          %s159 = scalar_lea.hbm %s0, %s158
          %s161 = sshll.u32 %s150, 4
          %s162 = int_to_ptr.vmem [resolvable:$true] %s161
          %164 = dma.hbm_to_vmem [thread:$0]  %s159, 128, %s162, %s147
        $region20: #{tpu_custom_call.1} parent=15 // pred_fallthru
          _
        // Predicated region
        $region21: #{tpu_custom_call.1} parent=15 // pred_check
          %p165 = pneg %p90
        $region22: #{tpu_custom_call.1} parent=15 // pred_check_branch
          %167 = sbr.rel (%p165) target = $region24
        $region23: #{tpu_custom_call.1} parent=15 // pred_region
          %s168 = sand.u32 %s80, 1
          %s169 = scalar_lea.sflag [#allocation6], %s168
          %s170 = sand.u32 %s80, 1
          %s171 = smul.addr %s170, 2
          %s172 = scalar_lea.vmem [#allocation5], %s171
          %s173 = sadd.s32 %s24, %s26
          %s174 = smul.u32 2, %s173
          %s176 = ssub.s32 32, 32
          %177 = vsyncadd %s169, %s176
          %s178 = smul.addr %s25, 2
          %s179 = sadd.s32 %s174, %s178
          %s180 = smul.addr %s179, 16
          %s181 = scalar_lea.hbm %s1, %s180
          %s183 = sshll.u32 %s172, 4
          %s184 = int_to_ptr.vmem [resolvable:$true] %s183
          %186 = dma.hbm_to_vmem [thread:$0]  %s181, 32, %s184, %s169
        $region24: #{tpu_custom_call.1} parent=15 // pred_fallthru
          _
      $region16: #{tpu_custom_call.1} parent=5 // pred_fallthru
        _
      %p187 = scmp.le.s32.totalorder 1, %s17
      %p188 = scmp.lt.s32.totalorder %s17, 3
      %p189 = pnand %p187, %p188
      %p190 = pneg %p189
      // Predicated region
      $region25: #{tpu_custom_call.1} parent=5 // pred_check
        _
      $region26: #{tpu_custom_call.1} parent=5 // pred_check_branch
        %192 = sbr.rel (%p189) target = $region28
      $region27: #{tpu_custom_call.1} parent=5 // pred_region
        %s193 = ssub.s32 %s17, 1
        %s194 = sand.u32 %s53, 1
        %s195 = scalar_lea.sflag [#allocation3], %s194
        %s196 = sand.u32 %s53, 1
        %s197 = smul.addr %s196, 8
        %s198 = scalar_lea.vmem [#allocation2], %s197
        // Predicated region
        $region29: #{tpu_custom_call.1} parent=27 // pred_check
          %p199 = pneg %p66
        $region30: #{tpu_custom_call.1} parent=27 // pred_check_branch
          %201 = sbr.rel (%p199) target = $region32
        $region31: #{tpu_custom_call.1} parent=27 // pred_region
          %202 = dma.done %s195, 128
        $region32: #{tpu_custom_call.1} parent=27 // pred_fallthru
          _
        %s203 = sand.u32 %s83, 1
        %s204 = scalar_lea.sflag [#allocation6], %s203
        %s205 = sand.u32 %s83, 1
        %s206 = smul.addr %s205, 2
        %s207 = scalar_lea.vmem [#allocation5], %s206
        // Predicated region
        $region33: #{tpu_custom_call.1} parent=27 // pred_check
          %p208 = pneg %p96
        $region34: #{tpu_custom_call.1} parent=27 // pred_check_branch
          %210 = sbr.rel (%p208) target = $region36
        $region35: #{tpu_custom_call.1} parent=27 // pred_region
          %211 = dma.done %s204, 32
        $region36: #{tpu_custom_call.1} parent=27 // pred_fallthru
          _
        %s212 = sand.u32 %s53, 1
        %s213 = scalar_lea.sflag [#allocation3], %s212
        %s214 = sand.u32 %s53, 1
        %s215 = smul.addr %s214, 8
        %s216 = scalar_lea.vmem [#allocation2], %s215
        %p217 = pneg %p66
        %p218 = pneg %p63
        %s219 = sand.u32 %s83, 1
        %s220 = scalar_lea.sflag [#allocation6], %s219
        %s221 = sand.u32 %s83, 1
        %s222 = smul.addr %s221, 2
        %s223 = scalar_lea.vmem [#allocation5], %s222
        %p224 = pneg %p96
        %p225 = pneg %p93
        %p226 = pneg %p124
        %p227 = pneg %p121
        %s228 = sand.u32 %s111, 1
        %s229 = scalar_lea.sflag [#allocation4], %s228
        %s230 = sand.u32 %s111, 1
        %s231 = smul.addr %s230, 2
        %s232 = scalar_lea.vmem [#allocation7], %s231
        %s233 = sadd.s32 %s27, %s29
        %s234 = smul.u32 2, %s233
        %s235 = sadd.s32 %s27, %s29
        %s236 = smul.u32 2, %s235
        %p237 = scmp.eq.s32.totalorder %s29, 0
        // Predicated region
        $region37: #{tpu_custom_call.1} parent=27 // pred_check
          %p238 = pneg %p237
        $region38: #{tpu_custom_call.1} parent=27 // pred_check_branch
          %240 = sbr.rel (%p238) target = $region40
        $region39: #{tpu_custom_call.1} parent=27 // pred_region
          %v241 = vlaneseq
          %vm242 = vcmp.ge.s32.totalorder %v241, 0
          %vm243 = vcmp.lt.s32.totalorder %v241, 256
          %vm244 = vmand %vm242, %vm243
          %245 = vst.msk [vmem:[%s232] sm:$0x3] %vm244, 0.0
        $region40: #{tpu_custom_call.1} parent=27 // pred_fallthru
          _
        %v246 = vld [vmem:[%s198] sm:$0xff]
        %v247 = vld [vmem:[%s207] sm:$0x3]
        %v249 = vcombine.high %v246, %v246
        %vm251 = vcmask 1043456
        %v252 = vsel %vm251, %v246, -inf
        %v253 = vrot.slane %v252, 4
        %v254 = vmax.f32 %v252, %v253
        %v255 = vrot.slane %v254, 2
        %v256 = vmax.f32 %v254, %v255
        %v257 = vrot.slane %v256, 1
        %v258 = vmax.f32 %v256, %v257
        %v259 = vsel %vm251, %v249, -inf
        %v260 = vrot.slane %v259, 4
        %v261 = vmax.f32 %v259, %v260
        %v262 = vrot.slane %v261, 2
        %v263 = vmax.f32 %v261, %v262
        %v264 = vrot.slane %v263, 1
        %v265 = vmax.f32 %v263, %v264
        %v268 = vcombine.low %v258, %v265
        %v270 = vsub.f32 %v246, %v268
        %v271 = vmul.f32 %v270, 1.442695
        %v272 = vpow.pop %v271
        %v274 = vcombine.high %v272, %v272
        %v276 = vsel %vm251, %v272, 0.0
        %v277 = vrot.slane %v276, 4
        %v278 = vadd.f32 %v276, %v277
        %v279 = vrot.slane %v278, 2
        %v280 = vadd.f32 %v278, %v279
        %v281 = vrot.slane %v280, 1
        %v282 = vadd.f32 %v280, %v281
        %v283 = vsel %vm251, %v274, 0.0
        %v284 = vrot.slane %v283, 4
        %v285 = vadd.f32 %v283, %v284
        %v286 = vrot.slane %v285, 2
        %v287 = vadd.f32 %v285, %v286
        %v288 = vrot.slane %v287, 1
        %v289 = vadd.f32 %v287, %v288
        %v290 = vlaneseq
        %v291 = vshrl.u32 %v290, 7
        %v292 = vlaneseq
        %v293 = vshrl.u32 %v292, 7
        %v294 = vsub.s32 0, %v293
        %v295 = vrot.slane %v247, %v294
        %v296 = vlaneseq
        %v297 = vshrl.u32 %v296, 7
        %v298 = vsub.s32 1, %v297
        %v299 = vrot.slane %v247, %v298
        %vm300 = vcmp.eq.s32.totalorder %v291, %v295
        %vm301 = vcmp.eq.s32.totalorder %v291, %v299
        %v303 = vcombine.high %v270, %v270
        %v305 = vsel %vm300, %v270, 0.0
        %v306 = vsel %vm301, %v303, 0.0
        %v307 = vsel %vm251, %v305, 0.0
        %v308 = vrot.slane %v307, 4
        %v309 = vadd.f32 %v307, %v308
        %v310 = vrot.slane %v309, 2
        %v311 = vadd.f32 %v309, %v310
        %v312 = vrot.slane %v311, 1
        %v313 = vadd.f32 %v311, %v312
        %v314 = vsel %vm251, %v306, 0.0
        %v315 = vrot.slane %v314, 4
        %v316 = vadd.f32 %v314, %v315
        %v317 = vrot.slane %v316, 2
        %v318 = vadd.f32 %v316, %v317
        %v319 = vrot.slane %v318, 1
        %v320 = vadd.f32 %v318, %v319
        %v321 = vlog2.pop %v282
        %v322 = vmul.f32 %v321, 0.6931472
        %v323 = vlog2.pop %v289
        %v324 = vmul.f32 %v323, 0.6931472
        %v325 = vsub.f32 %v322, %v313
        %v326 = vsub.f32 %v324, %v320
        %v327 = vsub.f32 0.0, %v325
        %v328 = vsub.f32 0.0, %v326
        %v329 = vmul.f32 %v327, 1.442695
        %v330 = vpow.pop %v329
        %v331 = vmul.f32 %v328, 1.442695
        %v332 = vpow.pop %v331
        %v333 = vsub.f32 1.0, %v330
        %v334 = vsub.f32 1.0, %v332
        %v335 = vmul.f32 %v333, %v333
        %v336 = vmul.f32 %v334, %v334
        %v337 = vmul.f32 %v335, 0.75
        %v338 = vmul.f32 %v336, 0.75
        %v339 = vmul.f32 %v337, %v325
        %v340 = vmul.f32 %v338, %v326
        %v341 = vld [vmem:[%s232] sm:$0x3]
        %v344 = vcombine.low %v339, %v340
        %v346 = vunpack.c.l.s4 1966171168
        %v347 = vunpack.c.0.s8 %v346
        %v348 = vlaneseq
        %v349 = vshrl.u32 %v348, 7
        %v350 = vsub.s32 %v347, %v349
        %v351 = vrot.slane %v344, %v350
        %v353 = vunpack.c.l.s4 1966171168
        %v354 = vunpack.c.0.s8 %v353
        %v355 = vlaneseq
        %v356 = vshrl.u32 %v355, 7
        %v357 = vsub.s32 %v354, %v356
        %v358 = vrot.slane %v351, %v357
        %v360 = vadd.f32 %v341, %v358
        %v361 = vlaneseq
        %vm362 = vcmp.ge.s32.totalorder %v361, 0
        %vm363 = vcmp.lt.s32.totalorder %v361, 256
        %vm364 = vmand %vm362, %vm363
        %365 = vst.msk [vmem:[%s232] sm:$0x3] %vm364, %v360
        %s366 = sand.u32 %s111, 1
        %s367 = scalar_lea.sflag [#allocation4], %s366
        %s368 = sand.u32 %s111, 1
        %s369 = smul.addr %s368, 2
        %s370 = scalar_lea.vmem [#allocation7], %s369
        // Predicated region
        $region41: #{tpu_custom_call.1} parent=27 // pred_check
          %p371 = pneg %p121
        $region42: #{tpu_custom_call.1} parent=27 // pred_check_branch
          %373 = sbr.rel (%p371) target = $region44
        $region43: #{tpu_custom_call.1} parent=27 // pred_region
          %s375 = ssub.s32 32, 32
          %376 = vsyncadd %s367, %s375
          %s377 = smul.addr %s28, 2
          %s378 = smul.addr %s27, 4
          %s379 = sadd.s32 %s377, %s378
          %s380 = smul.addr %s379, 16
          %s381 = scalar_lea.hbm %s2, %s380
          %s383 = sshll.u32 %s370, 4
          %s384 = int_to_ptr.vmem [resolvable:$true] %s383
          %386 = dma.vmem_to_hbm [thread:$0]  %s384, 32, %s381, %s367
        $region44: #{tpu_custom_call.1} parent=27 // pred_fallthru
          _
      $region28: #{tpu_custom_call.1} parent=5 // pred_fallthru
        _
      %p387 = scmp.le.s32.totalorder 2, %s17
      // Predicated region
      $region45: #{tpu_custom_call.1} parent=5 // pred_check
        %p388 = pneg %p387
      $region46: #{tpu_custom_call.1} parent=5 // pred_check_branch
        %390 = sbr.rel (%p388) target = $region48
      $region47: #{tpu_custom_call.1} parent=5 // pred_region
        %s391 = ssub.s32 %s17, 2
        // Predicated region
        $region49: #{tpu_custom_call.1} parent=47 // pred_check
          %p392 = pneg %p127
        $region50: #{tpu_custom_call.1} parent=47 // pred_check_branch
          %394 = sbr.rel (%p392) target = $region52
        $region51: #{tpu_custom_call.1} parent=47 // pred_region
          %s395 = sand.u32 %s112, 1
          %s396 = scalar_lea.sflag [#allocation4], %s395
          %s397 = sand.u32 %s112, 1
          %s398 = smul.addr %s397, 2
          %s399 = scalar_lea.vmem [#allocation7], %s398
          %400 = dma.done %s396, 32
        $region52: #{tpu_custom_call.1} parent=47 // pred_fallthru
          _
      $region48: #{tpu_custom_call.1} parent=5 // pred_fallthru
        _
    $region6: #{tpu_custom_call.1} parent=1 // loop_footer
      %s21 = sadd.s32 1, %s17
    $region7: #{tpu_custom_call.1} parent=1 // loop_footer_branch
      %16 = sbr.rel target = $region3
    $region8: #{tpu_custom_call.1} parent=1 // loop_exit
      _
    %401 = vsyncpa [#allocation3], 1
    %s402 = scalar_lea.sflag [#allocation3], 1
    %403 = vsyncpa %s402, 1
    %404 = vsyncpa [#allocation6], 1
    %s405 = scalar_lea.sflag [#allocation6], 1
    %406 = vsyncpa %s405, 1
    %407 = vsyncpa [#allocation4], 1
    %s408 = scalar_lea.sflag [#allocation4], 1
    %409 = vsyncpa %s408, 1

</llo_original>
